<compile_context>
chip_gen: v5e
topology: v5e:2x2
jax: 0.10.0
libtpu: 0.0.40
codegen_flags: <defaults>
</compile_context>

<pallas_src>
from collections import namedtuple

import numpy as np
import jax
import jax.numpy as jnp
from jax.experimental import pallas as pl
from jax.experimental.pallas import tpu as pltpu

LANE = 128
SUBLANE = 8
_ACC_ROWS_MAX = 64               # wide accumulator: 64x128 f32 = 16 vregs
_VMEM_INPUT_BUDGET = 16 << 20    # budget for all double-buffered input blocks


def _round_up(a, b):
    return -(-a // b) * b


def _device_kind():
    try:
        return jax.devices()[0].device_kind.lower()
    except Exception:
        return ""


def _device_num_cores():
    kind = _device_kind()
    # v4 / v5p (megacore) and v7x expose 2 TensorCores of parallelism per
    # device; v5e / v6e are single-TC.  A wrong guess only serializes the
    # (still correct) leading grid axis.
    # TODO(synk): on v7x, verify on xprof that "parallel" actually shards the
    # core axis; switch to pltpu.CORE_PARALLEL if it does not.
    return 2 if any(t in kind for t in ("v4", "v5p", "v7")) else 1


def _device_block_bytes():
    # v7x streams HBM ~2.3x faster than v6e, so use bigger blocks there to
    # keep the ~0.35us/grid-step overhead small relative to the DMA time.
    return (4 << 20) if "v7" in _device_kind() else (2 << 20)


# ----------------------------- elementwise loss -----------------------------
def _softplus(z):
    # numerically-stable softplus (matches F.softplus)
    return jnp.maximum(z, 0.0) + jnp.log1p(jnp.exp(-jnp.abs(z)))


def _make_elementwise(mode, target_val, sign):
    """Return (per-element f32 loss fn, static multiplier folded into the
    per-scale weight).  All parameters are baked as compile-time constants."""
    if mode == "vanilla":
        t = float(target_val)
        if t == 1.0:
            return (lambda x: _softplus(-x)), 1.0
        if t == 0.0:
            return _softplus, 1.0
        return (lambda x: jnp.maximum(x, 0.0) - t * x
                + jnp.log1p(jnp.exp(-jnp.abs(x)))), 1.0
    if mode == "lsgan":
        t = float(target_val)
        return (lambda x: (x - t) * (x - t)), 1.0
    if mode == "wgan":
        # loss = sign * mean(x): identity elementwise, sign folded into weight.
        return (lambda x: x), float(sign)
    if mode == "wgan_softplus":
        s = float(sign)
        # TODO(synk): EUP-bound on v7x (2 transcendentals/element); a bf16
        # exp/log1p path would be needed to reach the HBM roofline there.
        return (lambda x: _softplus(s * x)), 1.0
    if mode == "hinge_disc":
        s = float(sign)
        return (lambda x: jnp.maximum(1.0 + s * x, 0.0)), 1.0
    if mode == "neg_mean":
        return (lambda x: x), -1.0
    raise NotImplementedError(mode)


# ------------------------------- fused kernel -------------------------------
_ScaleMeta = namedtuple("_ScaleMeta",
                        ["start", "nb", "num_full", "ragged_valid", "weight"])


def _make_fused_kernel(elem_fn, metas, *, tile_r, acc_rows, nb_per_core):
    n_scales = len(metas)
    nch = tile_r // acc_rows
    full_block_elems = tile_r * LANE

    def block_partial(x_ref, valid_elems):
        """Sum of elem_fn over the valid prefix of one (tile_r,128) block,
        reduced to a wide (acc_rows,128) partial.  Consumed in vreg-sized
        sub-chunks so no full f32 block temp is materialized."""
        acc = jnp.zeros((acc_rows, LANE), jnp.float32)
        for k in range(nch):
            c0 = k * acc_rows * LANE
            if c0 >= valid_elems:          # fully invalid chunk: skip (static)
                break
            v = elem_fn(x_ref[pl.ds(k * acc_rows, acc_rows), :]
                        .astype(jnp.float32))
            if c0 + acc_rows * LANE > valid_elems:   # partially valid: mask
                row = jax.lax.broadcasted_iota(jnp.int32, (acc_rows, LANE), 0)
                col = jax.lax.broadcasted_iota(jnp.int32, (acc_rows, LANE), 1)
                idx = c0 + row * LANE + col
                # loss is evaluated on undefined edge data but never escapes
                # the where (safe, per review).
                v = jnp.where(idx < valid_elems, v, 0.0)
            acc = acc + v
        return acc

    def kernel(*refs):
        x_refs = refs[:n_scales]
        out_ref = refs[n_scales]
        acc_ref = refs[n_scales + 1]
        c = pl.program_id(0)
        i = pl.program_id(1)
        b = c * nb_per_core + i            # global block index

        @pl.when(i == 0)
        def _():
            acc_ref[...] = jnp.zeros_like(acc_ref)

        # Static per-scale block ranges; only the active branch executes.
        for m, x_ref in zip(metas, x_refs):
            w = jnp.float32(m.weight)
            if m.num_full > 0:
                lo, hi = m.start, m.start + m.num_full

                @pl.when((b >= lo) & (b < hi))
                def _(x_ref=x_ref, w=w):               # unmasked fast path
                    acc_ref[...] += w * block_partial(x_ref, full_block_elems)

            if m.ragged_valid is not None:
                rb = m.start + m.nb - 1

                @pl.when(b == rb)
                def _(x_ref=x_ref, w=w, valid=m.ragged_valid):  # masked path
                    acc_ref[...] += w * block_partial(x_ref, valid)

        @pl.when(i == nb_per_core - 1)
        def _():
            a = acc_ref[...]
            out_ref[...] = a.reshape(acc_rows // SUBLANE, SUBLANE, LANE).sum(0)

    return kernel


def _fused_gan_loss(preds, mode, *, target_val=0.0, sign=0.0, scale_div=None,
                    loss_scale=1.0, max_tile_rows=None):
    """sum_j loss_scale/(n_j*scale_div) * sum(elem_loss(pred_j)), one kernel."""
    preds = [p for p in preds if int(np.prod(p.shape)) > 0]
    if not preds:
        return jnp.float32(0.0)
    scale_div = len(preds) if scale_div is None else scale_div
    elem_fn, extra_w = _make_elementwise(mode, target_val, sign)

    slabs, counts = [], []
    max_rows, max_itemsize = 0, 1
    for p in preds:
        n = int(np.prod(p.shape))
        flat = p.reshape(-1)               # metadata reshape, keeps dtype
        if n % LANE != 0:
            # Small pad copy only for ragged scales; the padded lanes are
            # excluded by the static valid-count mask inside the kernel.
            flat = jnp.concatenate(
                [flat, jnp.zeros((_round_up(n, LANE) - n,), flat.dtype)])
        rows = flat.shape[0] // LANE
        slabs.append(flat.reshape(rows, LANE))   # lane-dense view
        counts.append((n, rows))
        max_rows = max(max_rows, rows)
        max_itemsize = max(max_itemsize, jnp.dtype(flat.dtype).itemsize)

    n_scales = len(slabs)
    # Block size: big enough to amortize per-step overhead, small enough that
    # n_scales double-buffered input blocks stay well inside VMEM.
    blk_bytes = min(_device_block_bytes(),
                    max(64 * 1024, _VMEM_INPUT_BUDGET // (2 * n_scales)))
    tile_r = max(SUBLANE, blk_bytes // (LANE * max_itemsize))
    tile_r = min(tile_r, _round_up(max_rows, SUBLANE))
    if max_tile_rows is not None:
        tile_r = min(tile_r, int(max_tile_rows))
    if tile_r >= _ACC_ROWS_MAX:
        tile_r = _round_up(tile_r, _ACC_ROWS_MAX)
        acc_rows = _ACC_ROWS_MAX
    else:
        tile_r = _round_up(tile_r, SUBLANE)
        acc_rows = tile_r

    # Per-scale block layout (all static).
    metas, start = [], 0
    for n, rows in counts:
        nb = max(1, -(-rows // tile_r))
        valid_last = n - (nb - 1) * tile_r * LANE
        has_ragged = valid_last < tile_r * LANE
        weight = extra_w * loss_scale / (n * scale_div)
        metas.append(_ScaleMeta(start=start, nb=nb,
                                num_full=nb - (1 if has_ragged else 0),
                                ragged_valid=(valid_last if has_ragged else None),
                                weight=float(weight)))
        start += nb
    total_blocks = start

    ncores = min(_device_num_cores(), total_blocks)
    nb_per_core = -(-total_blocks // ncores)

    kernel = _make_fused_kernel(elem_fn, metas, tile_r=tile_r,
                                acc_rows=acc_rows, nb_per_core=nb_per_core)

    def make_index_map(s_start, s_nb):
        # Clamp: before/after this scale's turn the index is pinned, so the
        # pipeline fetches each block exactly once (plus at most one clamped
        # block per scale per core).
        def index_map(c, i):
            blk = c * nb_per_core + i - s_start
            return (jnp.clip(blk, 0, s_nb - 1), 0)
        return index_map

    in_specs = [pl.BlockSpec((tile_r, LANE), make_index_map(m.start, m.nb))
                for m in metas]

    vmem_need = 2 * n_scales * tile_r * LANE * max_itemsize + (4 << 20)
    partials = pl.pallas_call(
        kernel,
        out_shape=jax.ShapeDtypeStruct((ncores * SUBLANE, LANE), jnp.float32),
        grid_spec=pltpu.PrefetchScalarGridSpec(
            num_scalar_prefetch=0,
            grid=(ncores, nb_per_core),
            in_specs=in_specs,
            out_specs=pl.BlockSpec((SUBLANE, LANE), lambda c, i: (c, 0)),
            scratch_shapes=[pltpu.VMEM((acc_rows, LANE), jnp.float32)],
        ),
        compiler_params=pltpu.CompilerParams(
            dimension_semantics=("parallel", "arbitrary"),
            vmem_limit_bytes=int(min(max(32 << 20, vmem_need), 48 << 20)),
        ),
    )(*slabs)
    # Single tiny trailing reduce for the whole multi-scale loss.
    return jnp.sum(partials)


# ------------------------------- loss modules --------------------------------
class GANLossPallas:
    """Pallas-backed equivalent of basicsr GANLoss.forward."""

    def __init__(self, gan_type, real_label_val=1.0, fake_label_val=0.0,
                 loss_weight=1.0):
        if gan_type not in ("vanilla", "lsgan", "wgan", "wgan_softplus", "hinge"):
            raise NotImplementedError(f"GAN type {gan_type} is not implemented.")
        self.gan_type = gan_type
        self.real_label_val = real_label_val
        self.fake_label_val = fake_label_val
        self.loss_weight = loss_weight

    def _loss_params(self, target_is_real, is_disc):
        gt = self.gan_type
        if gt in ("vanilla", "lsgan"):
            tv = self.real_label_val if target_is_real else self.fake_label_val
            return gt, tv, 0.0
        if gt in ("wgan", "wgan_softplus"):
            return gt, 0.0, (-1.0 if target_is_real else 1.0)
        if is_disc:                       # hinge, discriminator
            return "hinge_disc", 0.0, (-1.0 if target_is_real else 1.0)
        return "neg_mean", 0.0, 0.0       # hinge, generator

    def __call__(self, x, target_is_real, is_disc=False):
        mode, tv, sg = self._loss_params(target_is_real, is_disc)
        lw = 1.0 if is_disc else self.loss_weight
        return _fused_gan_loss([x], mode, target_val=tv, sign=sg,
                               scale_div=1, loss_scale=lw)


class MultiScaleGANLossPallas(GANLossPallas):
    """MultiScaleGANLoss: accepts a list of predictions (or list of lists).
    All scales are fused into one pallas_call."""

    def __call__(self, input, target_is_real, is_disc=False):
        if isinstance(input, (list, tuple)):
            preds = [p[-1] if isinstance(p, (list, tuple)) else p for p in input]
            mode, tv, sg = self._loss_params(target_is_real, is_disc)
            lw = 1.0 if is_disc else self.loss_weight
            # super().forward(...).mean() per scale, averaged over scales:
            # folded into per-scale weights of the single fused kernel.
            return _fused_gan_loss(preds, mode, target_val=tv, sign=sg,
                                   scale_div=len(preds), loss_scale=lw)
        return super().__call__(input, target_is_real, is_disc)


# ------------------ pure-JAX reference (for verification) ------------------
def _ref_gan_loss(x, gan_type, target_is_real, is_disc, rv, fv, lw):
    x = x.astype(jnp.float32)
    if gan_type == "vanilla":
        t = rv if target_is_real else fv
        loss = jnp.mean(jnp.maximum(x, 0.0) - x * t
                        + jnp.log1p(jnp.exp(-jnp.abs(x))))
    elif gan_type == "lsgan":
        t = rv if target_is_real else fv
        loss = jnp.mean((x - t) ** 2)
    elif gan_type == "wgan":
        loss = -jnp.mean(x) if target_is_real else jnp.mean(x)
    elif gan_type == "wgan_softplus":
        loss = jnp.mean(_softplus(-x)) if target_is_real else jnp.mean(_softplus(x))
    else:  # hinge
        if is_disc:
            xi = -x if target_is_real else x
            loss = jnp.mean(jnp.maximum(1.0 + xi, 0.0))
        else:
            loss = -jnp.mean(x)
    return loss if is_disc else loss * lw


def _ref_multiscale(preds, gan_type, target_is_real, is_disc, rv, fv, lw):
    total = jnp.float32(0.0)
    for p in preds:
        if isinstance(p, (list, tuple)):
            p = p[-1]
        total = total + _ref_gan_loss(p, gan_type, target_is_real, is_disc,
                                      rv, fv, lw)
    return total / len(preds)


if __name__ == "__main__":
    key = jax.random.PRNGKey(0)
    ks = jax.random.split(key, 8)

    # Multi-scale discriminator predictions (NCHW); nested list's last element
    # is the prediction (intermediate features ignored).  p2 is lane-ragged.
    p0 = jax.random.normal(ks[0], (2, 4, 16, 16), jnp.float32)
    p1_feat = jax.random.normal(ks[1], (2, 8, 8, 8), jnp.float32)
    p1 = jax.random.normal(ks[2], (2, 4, 8, 8), jnp.float32)
    p2 = jax.random.normal(ks[3], (2, 1, 30, 30), jnp.float32)   # 1800 % 128 != 0
    preds = [p0, [p1_feat, p1], p2]

    ok = True
    for gan_type, target_is_real, is_disc in [
        ("lsgan", True, False),
        ("vanilla", False, True),
        ("vanilla", True, False),
        ("hinge", True, True),
        ("hinge", False, False),
        ("wgan", False, True),
        ("wgan_softplus", True, False),
    ]:
        mod = MultiScaleGANLossPallas(gan_type, real_label_val=1.0,
                                      fake_label_val=0.0, loss_weight=0.5)
        out = jax.block_until_ready(mod(preds, target_is_real, is_disc))
        ref = _ref_multiscale(preds, gan_type, target_is_real, is_disc,
                              1.0, 0.0, 0.5)
        if not np.allclose(np.asarray(out), np.asarray(ref), rtol=1e-5, atol=1e-5):
            ok = False
            print(f"MISMATCH {gan_type} real={target_is_real} disc={is_disc}: "
                  f"pallas={out} ref={ref}")

    # Multi-block + mixed full/ragged scales in one fused grid (small tile
    # override keeps the demo shapes small while exercising the block loop).
    xa = jax.random.normal(ks[4], (2, 4, 40, 32), jnp.float32)   # 80 rows -> 5 blocks
    xb = jax.random.normal(ks[5], (2, 1, 30, 30), jnp.float32)   # ragged, 1 block
    out = jax.block_until_ready(
        _fused_gan_loss([xa, xb], "lsgan", target_val=1.0, sign=0.0,
                        scale_div=2, loss_scale=1.0, max_tile_rows=16))
    ref = 0.5 * (jnp.mean((xa - 1.0) ** 2) + jnp.mean((xb - 1.0) ** 2))
    if not np.allclose(np.asarray(out), np.asarray(ref), rtol=1e-5, atol=1e-5):
        ok = False
        print("MISMATCH multi-block lsgan:", out, ref)

    # bf16 input path (single tensor, GANLoss fallback).
    xc = jax.random.normal(ks[6], (2, 4, 16, 16), jnp.bfloat16)
    gl = GANLossPallas("hinge", loss_weight=1.0)
    out = jax.block_until_ready(gl(xc, True, is_disc=True))
    ref = jnp.mean(jnp.maximum(1.0 - xc.astype(jnp.float32), 0.0))
    if not np.allclose(np.asarray(out), np.asarray(ref), rtol=1e-4, atol=1e-4):
        ok = False
        print("MISMATCH bf16 hinge:", out, ref)

    # Mixed-dtype scales in one fused call.
    out = jax.block_until_ready(
        MultiScaleGANLossPallas("lsgan", 1.0, 0.0, 1.0)([p0, xc], True, True))
    ref = 0.5 * (jnp.mean((p0 - 1.0) ** 2)
                 + jnp.mean((xc.astype(jnp.float32) - 1.0) ** 2))
    if not np.allclose(np.asarray(out), np.asarray(ref), rtol=1e-4, atol=1e-4):
        ok = False
        print("MISMATCH mixed-dtype lsgan:", out, ref)

    if ok:
        print("KERNEL_OK")
</pallas_src>

<mosaic_0001>
module attributes {stable_mosaic.version = 11 : i64} {
  func.func @kernel(%arg0: i32, %arg1: i32, %arg2: memref<16x128xf32, #tpu.memory_space<vmem>>, %arg3: memref<16x128xf32, #tpu.memory_space<vmem>>, %arg4: memref<16x128xf32, #tpu.memory_space<vmem>>, %arg5: memref<8x128xf32, #tpu.memory_space<vmem>>, %arg6: memref<16x128xf32, #tpu.memory_space<vmem>>) attributes {dimension_semantics = [#tpu.dimension_semantics<parallel>, #tpu.dimension_semantics<arbitrary>], iteration_bounds = array<i64: 1, 3>, scalar_prefetch = 0 : i64, scratch_operands = 1 : i64, tpu.core_type = #tpu.core_type<tc>, window_params = [{transform_indices = @transform_0, window_bounds = array<i64: 16, 128>}, {transform_indices = @transform_1, window_bounds = array<i64: 16, 128>}, {transform_indices = @transform_2, window_bounds = array<i64: 16, 128>}, {transform_indices = @transform_3, window_bounds = array<i64: 8, 128>}]} {
    %c3_i32 = arith.constant 3 : i32
    %0 = arith.muli %arg0, %c3_i32 : i32
    %1 = arith.addi %0, %arg1 : i32
    %c0_i32 = arith.constant 0 : i32
    %2 = arith.cmpi eq, %arg1, %c0_i32 : i32
    %3 = arith.extui %2 : i1 to i32
    %c0_i32_0 = arith.constant 0 : i32
    %4 = arith.cmpi ne, %3, %c0_i32_0 : i32
    scf.if %4 {
      %cst_10 = arith.constant 0.000000e+00 : f32
      %19 = vector.broadcast %cst_10 : f32 to vector<16x128xf32>
      %c0 = arith.constant 0 : index
      %c0_11 = arith.constant 0 : index
      %20 = vector.load %arg6[%c0, %c0_11] : memref<16x128xf32, #tpu.memory_space<vmem>>, vector<16x128xf32>
      tpu.vector_store %arg6[%c0, %c0_11], %19 {strides = array<i32>} : memref<16x128xf32, #tpu.memory_space<vmem>>, vector<16x128xf32>,
    } else {
    }
    %c0_i32_1 = arith.constant 0 : i32
    %5 = arith.cmpi sge, %1, %c0_i32_1 : i32
    %c1_i32 = arith.constant 1 : i32
    %6 = arith.cmpi slt, %1, %c1_i32 : i32
    %7 = arith.andi %5, %6 : i1
    %8 = arith.extui %7 : i1 to i32
    %cst = arith.constant 8.13802107E-5 : f32
    %c0_i32_2 = arith.constant 0 : i32
    %9 = arith.cmpi ne, %8, %c0_i32_2 : i32
    scf.if %9 {
      %c0 = arith.constant 0 : index
      %c0_10 = arith.constant 0 : index
      %19 = vector.load %arg6[%c0, %c0_10] : memref<16x128xf32, #tpu.memory_space<vmem>>, vector<16x128xf32>
      %cst_11 = arith.constant 0.000000e+00 : f32
      %20 = vector.broadcast %cst_11 : f32 to vector<16x128xf32>
      %c0_12 = arith.constant 0 : index
      %c0_13 = arith.constant 0 : index
      %21 = vector.load %arg2[%c0_12, %c0_13] : memref<16x128xf32, #tpu.memory_space<vmem>>, vector<16x128xf32>
      %cst_14 = arith.constant 1.000000e+00 : f32
      %22 = vector.broadcast %cst_14 : f32 to vector<16x128xf32>
      %23 = arith.subf %21, %22 : vector<16x128xf32>
      %cst_15 = arith.constant 1.000000e+00 : f32
      %24 = vector.broadcast %cst_15 : f32 to vector<16x128xf32>
      %25 = arith.subf %21, %24 : vector<16x128xf32>
      %26 = arith.mulf %23, %25 : vector<16x128xf32>
      %27 = arith.addf %20, %26 : vector<16x128xf32>
      %28 = vector.broadcast %cst : f32 to vector<16x128xf32>
      %29 = arith.mulf %28, %27 : vector<16x128xf32>
      %30 = arith.addf %19, %29 : vector<16x128xf32>
      %c0_16 = arith.constant 0 : index
      %c0_17 = arith.constant 0 : index
      %31 = vector.load %arg6[%c0_16, %c0_17] : memref<16x128xf32, #tpu.memory_space<vmem>>, vector<16x128xf32>
      tpu.vector_store %arg6[%c0_16, %c0_17], %30 {strides = array<i32>} : memref<16x128xf32, #tpu.memory_space<vmem>>, vector<16x128xf32>,
    } else {
    }
    %c1_i32_3 = arith.constant 1 : i32
    %10 = arith.cmpi eq, %1, %c1_i32_3 : i32
    %11 = arith.extui %10 : i1 to i32
    %cst_4 = arith.constant 3.25520843E-4 : f32
    %c0_i32_5 = arith.constant 0 : i32
    %12 = arith.cmpi ne, %11, %c0_i32_5 : i32
    scf.if %12 {
      %c0 = arith.constant 0 : index
      %c0_10 = arith.constant 0 : index
      %19 = vector.load %arg6[%c0, %c0_10] : memref<16x128xf32, #tpu.memory_space<vmem>>, vector<16x128xf32>
      %cst_11 = arith.constant 0.000000e+00 : f32
      %20 = vector.broadcast %cst_11 : f32 to vector<16x128xf32>
      %c0_12 = arith.constant 0 : index
      %c0_13 = arith.constant 0 : index
      %21 = vector.load %arg3[%c0_12, %c0_13] : memref<16x128xf32, #tpu.memory_space<vmem>>, vector<16x128xf32>
      %cst_14 = arith.constant 1.000000e+00 : f32
      %22 = vector.broadcast %cst_14 : f32 to vector<16x128xf32>
      %23 = arith.subf %21, %22 : vector<16x128xf32>
      %cst_15 = arith.constant 1.000000e+00 : f32
      %24 = vector.broadcast %cst_15 : f32 to vector<16x128xf32>
      %25 = arith.subf %21, %24 : vector<16x128xf32>
      %26 = arith.mulf %23, %25 : vector<16x128xf32>
      %27 = tpu.iota {dimensions = array<i32: 0>} : vector<16x128xi32>
      %28 = tpu.iota {dimensions = array<i32: 1>} : vector<16x128xi32>
      %c128_i32 = arith.constant 128 : i32
      %29 = vector.broadcast %c128_i32 : i32 to vector<16x128xi32>
      %30 = arith.muli %27, %29 : vector<16x128xi32>
      %c0_i32_16 = arith.constant 0 : i32
      %31 = vector.broadcast %c0_i32_16 : i32 to vector<16x128xi32>
      %32 = arith.addi %31, %30 : vector<16x128xi32>
      %33 = arith.addi %32, %28 : vector<16x128xi32>
      %c512_i32 = arith.constant 512 : i32
      %34 = vector.broadcast %c512_i32 : i32 to vector<16x128xi32>
      %35 = arith.cmpi slt, %33, %34 : vector<16x128xi32>
      %cst_17 = arith.constant 0.000000e+00 : f32
      %36 = vector.broadcast %cst_17 : f32 to vector<16x128xf32>
      %37 = arith.select %35, %26, %36 : vector<16x128xi1>, vector<16x128xf32>
      %38 = arith.addf %20, %37 : vector<16x128xf32>
      %39 = vector.broadcast %cst_4 : f32 to vector<16x128xf32>
      %40 = arith.mulf %39, %38 : vector<16x128xf32>
      %41 = arith.addf %19, %40 : vector<16x128xf32>
      %c0_18 = arith.constant 0 : index
      %c0_19 = arith.constant 0 : index
      %42 = vector.load %arg6[%c0_18, %c0_19] : memref<16x128xf32, #tpu.memory_space<vmem>>, vector<16x128xf32>
      tpu.vector_store %arg6[%c0_18, %c0_19], %41 {strides = array<i32>} : memref<16x128xf32, #tpu.memory_space<vmem>>, vector<16x128xf32>,
    } else {
    }
    %c2_i32 = arith.constant 2 : i32
    %13 = arith.cmpi eq, %1, %c2_i32 : i32
    %14 = arith.extui %13 : i1 to i32
    %cst_6 = arith.constant 9.25925924E-5 : f32
    %c0_i32_7 = arith.constant 0 : i32
    %15 = arith.cmpi ne, %14, %c0_i32_7 : i32
    scf.if %15 {
      %c0 = arith.constant 0 : index
      %c0_10 = arith.constant 0 : index
      %19 = vector.load %arg6[%c0, %c0_10] : memref<16x128xf32, #tpu.memory_space<vmem>>, vector<16x128xf32>
      %cst_11 = arith.constant 0.000000e+00 : f32
      %20 = vector.broadcast %cst_11 : f32 to vector<16x128xf32>
      %c0_12 = arith.constant 0 : index
      %c0_13 = arith.constant 0 : index
      %21 = vector.load %arg4[%c0_12, %c0_13] : memref<16x128xf32, #tpu.memory_space<vmem>>, vector<16x128xf32>
      %cst_14 = arith.constant 1.000000e+00 : f32
      %22 = vector.broadcast %cst_14 : f32 to vector<16x128xf32>
      %23 = arith.subf %21, %22 : vector<16x128xf32>
      %cst_15 = arith.constant 1.000000e+00 : f32
      %24 = vector.broadcast %cst_15 : f32 to vector<16x128xf32>
      %25 = arith.subf %21, %24 : vector<16x128xf32>
      %26 = arith.mulf %23, %25 : vector<16x128xf32>
      %27 = tpu.iota {dimensions = array<i32: 0>} : vector<16x128xi32>
      %28 = tpu.iota {dimensions = array<i32: 1>} : vector<16x128xi32>
      %c128_i32 = arith.constant 128 : i32
      %29 = vector.broadcast %c128_i32 : i32 to vector<16x128xi32>
      %30 = arith.muli %27, %29 : vector<16x128xi32>
      %c0_i32_16 = arith.constant 0 : i32
      %31 = vector.broadcast %c0_i32_16 : i32 to vector<16x128xi32>
      %32 = arith.addi %31, %30 : vector<16x128xi32>
      %33 = arith.addi %32, %28 : vector<16x128xi32>
      %c1800_i32 = arith.constant 1800 : i32
      %34 = vector.broadcast %c1800_i32 : i32 to vector<16x128xi32>
      %35 = arith.cmpi slt, %33, %34 : vector<16x128xi32>
      %cst_17 = arith.constant 0.000000e+00 : f32
      %36 = vector.broadcast %cst_17 : f32 to vector<16x128xf32>
      %37 = arith.select %35, %26, %36 : vector<16x128xi1>, vector<16x128xf32>
      %38 = arith.addf %20, %37 : vector<16x128xf32>
      %39 = vector.broadcast %cst_6 : f32 to vector<16x128xf32>
      %40 = arith.mulf %39, %38 : vector<16x128xf32>
      %41 = arith.addf %19, %40 : vector<16x128xf32>
      %c0_18 = arith.constant 0 : index
      %c0_19 = arith.constant 0 : index
      %42 = vector.load %arg6[%c0_18, %c0_19] : memref<16x128xf32, #tpu.memory_space<vmem>>, vector<16x128xf32>
      tpu.vector_store %arg6[%c0_18, %c0_19], %41 {strides = array<i32>} : memref<16x128xf32, #tpu.memory_space<vmem>>, vector<16x128xf32>,
    } else {
    }
    %c2_i32_8 = arith.constant 2 : i32
    %16 = arith.cmpi eq, %arg1, %c2_i32_8 : i32
    %17 = arith.extui %16 : i1 to i32
    %c0_i32_9 = arith.constant 0 : i32
    %18 = arith.cmpi ne, %17, %c0_i32_9 : i32
    scf.if %18 {
      %c0 = arith.constant 0 : index
      %c0_10 = arith.constant 0 : index
      %19 = vector.load %arg6[%c0, %c0_10] : memref<16x128xf32, #tpu.memory_space<vmem>>, vector<16x128xf32>
      %20 = vector.shape_cast %19 : vector<16x128xf32> to vector<2x8x128xf32>
      %cst_11 = arith.constant dense<0.000000e+00> : vector<8x128xf32>
      %21 = vector.multi_reduction <add>, %20, %cst_11 [0] : vector<2x8x128xf32> to vector<8x128xf32>
      %c0_12 = arith.constant 0 : index
      %c0_13 = arith.constant 0 : index
      %22 = vector.load %arg5[%c0_12, %c0_13] : memref<8x128xf32, #tpu.memory_space<vmem>>, vector<8x128xf32>
      tpu.vector_store %arg5[%c0_12, %c0_13], %21 {strides = array<i32>} : memref<8x128xf32, #tpu.memory_space<vmem>>, vector<8x128xf32>,
    } else {
    }
    return
  }
  func.func @transform_0(%arg0: i32, %arg1: i32) -> (i32, i32) {
    %c3_i32 = arith.constant 3 : i32
    %0 = arith.muli %arg0, %c3_i32 : i32
    %1 = arith.addi %0, %arg1 : i32
    %c0_i32 = arith.constant 0 : i32
    %2 = arith.subi %1, %c0_i32 : i32
    %c0_i32_0 = arith.constant 0 : i32
    %c0_i32_1 = arith.constant 0 : i32
    %3 = arith.maxsi %c0_i32_0, %2 : i32
    %4 = arith.minsi %c0_i32_1, %3 : i32
    %c0_i32_2 = arith.constant 0 : i32
    %c0_i32_3 = arith.constant 0 : i32
    return %4, %c0_i32_2 : i32, i32
  }
  func.func @transform_1(%arg0: i32, %arg1: i32) -> (i32, i32) {
    %c3_i32 = arith.constant 3 : i32
    %0 = arith.muli %arg0, %c3_i32 : i32
    %1 = arith.addi %0, %arg1 : i32
    %c1_i32 = arith.constant 1 : i32
    %2 = arith.subi %1, %c1_i32 : i32
    %c0_i32 = arith.constant 0 : i32
    %c0_i32_0 = arith.constant 0 : i32
    %3 = arith.maxsi %c0_i32, %2 : i32
    %4 = arith.minsi %c0_i32_0, %3 : i32
    %c0_i32_1 = arith.constant 0 : i32
    %c0_i32_2 = arith.constant 0 : i32
    return %4, %c0_i32_1 : i32, i32
  }
  func.func @transform_2(%arg0: i32, %arg1: i32) -> (i32, i32) {
    %c3_i32 = arith.constant 3 : i32
    %0 = arith.muli %arg0, %c3_i32 : i32
    %1 = arith.addi %0, %arg1 : i32
    %c2_i32 = arith.constant 2 : i32
    %2 = arith.subi %1, %c2_i32 : i32
    %c0_i32 = arith.constant 0 : i32
    %c0_i32_0 = arith.constant 0 : i32
    %3 = arith.maxsi %c0_i32, %2 : i32
    %4 = arith.minsi %c0_i32_0, %3 : i32
    %c0_i32_1 = arith.constant 0 : i32
    %c0_i32_2 = arith.constant 0 : i32
    return %4, %c0_i32_1 : i32, i32
  }
  func.func @transform_3(%arg0: i32, %arg1: i32) -> (i32, i32) {
    %c0_i32 = arith.constant 0 : i32
    %c0_i32_0 = arith.constant 0 : i32
    return %arg0, %c0_i32 : i32, i32
  }
}

</mosaic_0001>

<llo_original>
// kernel: tpu_custom_call.1
$region0: #{tpu_custom_call.1}
  #allocation0 [shape = 'u32[]', space=smem, size = 0x4, offset = 0x4, fixed_abs, tag = 'smem constant byte address 0x4 - core index']
  #allocation1 [shape = 'u32[72,128]{1,0:T(1,128)}', space=vmem, size = 0x9000, scoped, tag = 'internal scratch']
  #allocation2 [shape = 'f32[16,128]{1,0:T(8,128)}', space=vmem, size = 0x2000, scoped, tag = 'scratch operand']
  %s0 = inlined_call_operand.hbm [shape: f32[16,128], index: 0, kind: input, shape index: {}]
  %s1 = inlined_call_operand.hbm [shape: f32[4,128], index: 1, kind: input, shape index: {}]
  %s2 = inlined_call_operand.hbm [shape: f32[15,128], index: 2, kind: input, shape index: {}]
  %s3 = inlined_call_operand.hbm [shape: f32[8,128], index: 3, kind: output, shape index: {}]
  %s4 = sld [smem:[#allocation0]]
  $region77: #{tpu_custom_call.1} parent=0
    _
  %s6 = ssub.s32 1, %s4
  %s7 = scalar_select 0, %s6, %s4
  $region1: #{tpu_custom_call.1} parent=0
    #allocation3 [shape = 'u8[16384]{0}', space=vmem, size = 0x4000, scoped, tag = 'input window, operand 0']
    #allocation4 [shape = 's32[2]{0}', space=sflag, size = 0x8, scoped, tag = 'scoped memory for tpu_custom_call.1']
    #allocation5 [shape = 's32[2]{0}', space=sflag, size = 0x8, scoped, tag = 'scoped memory for tpu_custom_call.1']
    #allocation6 [shape = 'u8[16384]{0}', space=vmem, size = 0x4000, scoped, tag = 'input window, operand 1']
    #allocation7 [shape = 's32[2]{0}', space=sflag, size = 0x8, scoped, tag = 'scoped memory for tpu_custom_call.1']
    #allocation8 [shape = 'u8[16384]{0}', space=vmem, size = 0x4000, scoped, tag = 'input window, operand 2']
    #allocation9 [shape = 'u8[4096]{0}', space=vmem, size = 0x1000, scoped, tag = 'output window, operand 0, single buffered']
    %8 = vsyncpa [#allocation4], 0
    %s9 = scalar_lea.sflag [#allocation4], 1
    %10 = vsyncpa %s9, 0
    %11 = vsyncpa [#allocation7], 0
    %s12 = scalar_lea.sflag [#allocation7], 1
    %13 = vsyncpa %s12, 0
    %14 = vsyncpa [#allocation5], 0
    loop: start=0, step=1, limit=5
    $region2: #{tpu_custom_call.1} parent=1 // loop_pre_header
      _
    $region3: #{tpu_custom_call.1} parent=1 // loop_header
      %s16 = sphi 0, %s20
      %p17 = scmp.ge.s32.totalorder %s16, 5
      %s23 = sphi 0, %s35
      %s24 = sphi 0, %s31
      %s25 = sphi 0, %s23
      %s26 = sphi 0, %s24
      %s27 = sphi 0, %s25
      %s28 = sphi 0, %s26
      %s50 = sphi 0, %s52
      %s53 = sphi 0, %s50
      %s54 = sphi 0, %s53
      %s70 = sphi 0, %s54
      %s90 = sphi 0, %s92
      %s93 = sphi 0, %s90
      %s94 = sphi 0, %s93
      %s110 = sphi 0, %s94
      %s130 = sphi 0, %s132
      %s133 = sphi 0, %s130
      %s134 = sphi 0, %s133
      %s150 = sphi 0, %s134
      %s156 = sphi 0, %s158
      %s159 = sphi 0, %s156
      %s160 = sphi 0, %s159
      %s176 = sphi 0, %s160
    $region4: #{tpu_custom_call.1} parent=1 // loop_header_branch
      %19 = sbr.rel (%p17) target = $region8
    $region5: #{tpu_custom_call.1} parent=1 // loop_body
      %s21 = ssub.s32 %s16, 1
      %s22 = ssub.s32 %s16, 2
      %s29 = sadd.s32 1, %s24
      %p30 = scmp.ge.s32.totalorder %s29, 3
      %s31 = scalar_select %p30, 0, %s29
      %s32 = sadd.s32 1, %s23
      %s33 = scalar_select %p30, %s32, %s23
      %p34 = scmp.ge.s32.totalorder %s33, 1
      %s35 = scalar_select %p34, 0, %s33
      %s36 = smul.u32 %s23, 3
      %s37 = sadd.s32 %s36, %s24
      %p38 = scmp.gt.s32.totalorder %s37, 0
      %s39 = scalar_select %p38, %s37, 0
      %p40 = scmp.lt.s32.totalorder %s39, 0
      %s41 = scalar_select %p40, %s39, 0
      %s42 = smul.u32 %s35, 3
      %s43 = sadd.s32 %s42, %s31
      %p44 = scmp.gt.s32.totalorder %s43, 0
      %s45 = scalar_select %p44, %s43, 0
      %p46 = scmp.lt.s32.totalorder %s45, 0
      %s47 = scalar_select %p46, %s45, 0
      %s48 = ssub.s32 %s41, %s47
      %p49 = scmp.eq.s32.totalorder %s48, 0
      %s51 = sadd.s32 %s50, 1
      %s52 = scalar_select %p49, %s50, %s51
      %p55 = pneg %p49
      %p56 = scmp.eq.s32.totalorder %s16, 2
      %p57 = por %p55, %p56
      %p58 = scmp.ne.s32.totalorder %s50, %s53
      %p59 = scmp.eq.s32.totalorder %s16, 0
      %p60 = por %p58, %p59
      %p61 = scmp.ne.s32.totalorder %s50, %s53
      %p62 = scmp.eq.s32.totalorder %s21, 2
      %p63 = por %p61, %p62
      %p64 = scmp.ne.s32.totalorder %s53, %s54
      %p65 = scmp.eq.s32.totalorder %s21, 0
      %p66 = por %p64, %p65
      %p67 = scmp.ne.s32.totalorder %s53, %s54
      %p68 = scmp.eq.s32.totalorder %s22, 2
      %p69 = por %p67, %p68
      %p71 = scmp.ne.s32.totalorder %s54, %s70
      %p72 = scmp.eq.s32.totalorder %s22, 0
      %p73 = por %p71, %p72
      %s74 = smul.u32 %s23, 3
      %s75 = sadd.s32 %s74, %s24
      %s76 = ssub.s32 %s75, 1
      %p77 = scmp.gt.s32.totalorder %s76, 0
      %s78 = scalar_select %p77, %s76, 0
      %p79 = scmp.lt.s32.totalorder %s78, 0
      %s80 = scalar_select %p79, %s78, 0
      %s81 = smul.u32 %s35, 3
      %s82 = sadd.s32 %s81, %s31
      %s83 = ssub.s32 %s82, 1
      %p84 = scmp.gt.s32.totalorder %s83, 0
      %s85 = scalar_select %p84, %s83, 0
      %p86 = scmp.lt.s32.totalorder %s85, 0
      %s87 = scalar_select %p86, %s85, 0
      %s88 = ssub.s32 %s80, %s87
      %p89 = scmp.eq.s32.totalorder %s88, 0
      %s91 = sadd.s32 %s90, 1
      %s92 = scalar_select %p89, %s90, %s91
      %p95 = pneg %p89
      %p96 = scmp.eq.s32.totalorder %s16, 2
      %p97 = por %p95, %p96
      %p98 = scmp.ne.s32.totalorder %s90, %s93
      %p99 = scmp.eq.s32.totalorder %s16, 0
      %p100 = por %p98, %p99
      %p101 = scmp.ne.s32.totalorder %s90, %s93
      %p102 = scmp.eq.s32.totalorder %s21, 2
      %p103 = por %p101, %p102
      %p104 = scmp.ne.s32.totalorder %s93, %s94
      %p105 = scmp.eq.s32.totalorder %s21, 0
      %p106 = por %p104, %p105
      %p107 = scmp.ne.s32.totalorder %s93, %s94
      %p108 = scmp.eq.s32.totalorder %s22, 2
      %p109 = por %p107, %p108
      %p111 = scmp.ne.s32.totalorder %s94, %s110
      %p112 = scmp.eq.s32.totalorder %s22, 0
      %p113 = por %p111, %p112
      %s114 = smul.u32 %s23, 3
      %s115 = sadd.s32 %s114, %s24
      %s116 = ssub.s32 %s115, 2
      %p117 = scmp.gt.s32.totalorder %s116, 0
      %s118 = scalar_select %p117, %s116, 0
      %p119 = scmp.lt.s32.totalorder %s118, 0
      %s120 = scalar_select %p119, %s118, 0
      %s121 = smul.u32 %s35, 3
      %s122 = sadd.s32 %s121, %s31
      %s123 = ssub.s32 %s122, 2
      %p124 = scmp.gt.s32.totalorder %s123, 0
      %s125 = scalar_select %p124, %s123, 0
      %p126 = scmp.lt.s32.totalorder %s125, 0
      %s127 = scalar_select %p126, %s125, 0
      %s128 = ssub.s32 %s120, %s127
      %p129 = scmp.eq.s32.totalorder %s128, 0
      %s131 = sadd.s32 %s130, 1
      %s132 = scalar_select %p129, %s130, %s131
      %p135 = pneg %p129
      %p136 = scmp.eq.s32.totalorder %s16, 2
      %p137 = por %p135, %p136
      %p138 = scmp.ne.s32.totalorder %s130, %s133
      %p139 = scmp.eq.s32.totalorder %s16, 0
      %p140 = por %p138, %p139
      %p141 = scmp.ne.s32.totalorder %s130, %s133
      %p142 = scmp.eq.s32.totalorder %s21, 2
      %p143 = por %p141, %p142
      %p144 = scmp.ne.s32.totalorder %s133, %s134
      %p145 = scmp.eq.s32.totalorder %s21, 0
      %p146 = por %p144, %p145
      %p147 = scmp.ne.s32.totalorder %s133, %s134
      %p148 = scmp.eq.s32.totalorder %s22, 2
      %p149 = por %p147, %p148
      %p151 = scmp.ne.s32.totalorder %s134, %s150
      %p152 = scmp.eq.s32.totalorder %s22, 0
      %p153 = por %p151, %p152
      %s154 = ssub.s32 %s23, %s35
      %p155 = scmp.eq.s32.totalorder %s154, 0
      %s157 = sadd.s32 %s156, 1
      %s158 = scalar_select %p155, %s156, %s157
      %p161 = pneg %p155
      %p162 = scmp.eq.s32.totalorder %s16, 2
      %p163 = por %p161, %p162
      %p164 = scmp.ne.s32.totalorder %s156, %s159
      %p165 = scmp.eq.s32.totalorder %s16, 0
      %p166 = por %p164, %p165
      %p167 = scmp.ne.s32.totalorder %s156, %s159
      %p168 = scmp.eq.s32.totalorder %s21, 2
      %p169 = por %p167, %p168
      %p170 = scmp.ne.s32.totalorder %s159, %s160
      %p171 = scmp.eq.s32.totalorder %s21, 0
      %p172 = por %p170, %p171
      %p173 = scmp.ne.s32.totalorder %s159, %s160
      %p174 = scmp.eq.s32.totalorder %s22, 2
      %p175 = por %p173, %p174
      %p177 = scmp.ne.s32.totalorder %s160, %s176
      %p178 = scmp.eq.s32.totalorder %s22, 0
      %p179 = por %p177, %p178
      %p180 = scmp.le.s32.totalorder 1, %s16
      %p181 = scmp.lt.s32.totalorder %s16, 4
      %p182 = pnand %p180, %p181
      %p183 = pneg %p182
      // Predicated region
      $region9: #{tpu_custom_call.1} parent=5 // pred_check
        _
      $region10: #{tpu_custom_call.1} parent=5 // pred_check_branch
        %185 = sbr.rel (%p182) target = $region12
      $region11: #{tpu_custom_call.1} parent=5 // pred_region
        %s186 = ssub.s32 %s16, 1
      $region12: #{tpu_custom_call.1} parent=5 // pred_fallthru
        _
      %p187 = scmp.lt.s32.totalorder %s16, 3
      // Predicated region
      $region13: #{tpu_custom_call.1} parent=5 // pred_check
        %p188 = pneg %p187
      $region14: #{tpu_custom_call.1} parent=5 // pred_check_branch
        %190 = sbr.rel (%p188) target = $region16
      $region15: #{tpu_custom_call.1} parent=5 // pred_region
        // Predicated region
        $region17: #{tpu_custom_call.1} parent=15 // pred_check
          %p191 = pneg %p60
        $region18: #{tpu_custom_call.1} parent=15 // pred_check_branch
          %193 = sbr.rel (%p191) target = $region20
        $region19: #{tpu_custom_call.1} parent=15 // pred_region
          %s194 = sand.u32 %s50, 1
          %s195 = scalar_lea.sflag [#allocation4], %s194
          %s196 = sand.u32 %s50, 1
          %s197 = smul.addr %s196, 16
          %s198 = scalar_lea.vmem [#allocation3], %s197
          %s199 = smul.u32 %s23, 3
          %s200 = sadd.s32 %s199, %s24
          %p201 = scmp.gt.s32.totalorder %s200, 0
          %s202 = scalar_select %p201, %s200, 0
          %p203 = scmp.lt.s32.totalorder %s202, 0
          %s204 = scalar_select %p203, %s202, 0
          %s205 = smul.u32 2, %s204
          %207 = vsyncadd %s195, 0
          %s208 = smul.addr %s205, 8
          %s209 = scalar_lea.hbm %s0, %s208
          %s210 = sshll.u32 %s209, 4
          %s211 = int_to_ptr.hbm [resolvable:$true] %s210
          %s212 = sshll.u32 %s198, 4
          %s213 = int_to_ptr.vmem [resolvable:$true] %s212
          %218 = dma.hbm_to_vmem [thread:$0]  %s211, 256, %s213, %s195, 128, 128, 8
        $region20: #{tpu_custom_call.1} parent=15 // pred_fallthru
          _
        // Predicated region
        $region21: #{tpu_custom_call.1} parent=15 // pred_check
          %p219 = pneg %p100
        $region22: #{tpu_custom_call.1} parent=15 // pred_check_branch
          %221 = sbr.rel (%p219) target = $region24
        $region23: #{tpu_custom_call.1} parent=15 // pred_region
          %s222 = sand.u32 %s16, 1
          %s223 = scalar_lea.sflag [#allocation7], %s222
          %s224 = sand.u32 %s90, 1
          %s225 = smul.addr %s224, 16
          %s226 = scalar_lea.vmem [#allocation6], %s225
          %s227 = smul.u32 %s23, 3
          %s228 = sadd.s32 %s227, %s24
          %s229 = ssub.s32 %s228, 1
          %p230 = scmp.gt.s32.totalorder %s229, 0
          %s231 = scalar_select %p230, %s229, 0
          %p232 = scmp.lt.s32.totalorder %s231, 0
          %s233 = scalar_select %p232, %s231, 0
          %s234 = smul.u32 4, %s233
          %s235 = ssub.s32 1, %s234
          %s236 = smul.u32 4, %s235
          %s237 = ssub.s32 16, %s236
          %s238 = sshll.u32 %s237, 4
          %239 = vsyncadd %s223, %s238
          %p240 = scmp.ne.s32.totalorder 0, %s236
          %s241 = smul.addr %s234, 4
          %s242 = scalar_lea.hbm %s1, %s241
          %s243 = smul.u32 4, %s235
          %s244 = sshll.u32 %s242, 4
          %s245 = int_to_ptr.hbm [resolvable:$true] %s244
          %s246 = sshll.u32 %s226, 4
          %s247 = int_to_ptr.vmem [resolvable:$true] %s246
          %s248 = sshll.u32 %s243, 4
          %252 = dma.hbm_to_vmem [thread:$0]  (%p240), %s245, %s248, %s247, %s223, 64, 64, 4
        $region24: #{tpu_custom_call.1} parent=15 // pred_fallthru
          _
        // Predicated region
        $region25: #{tpu_custom_call.1} parent=15 // pred_check
          %p253 = pneg %p140
        $region26: #{tpu_custom_call.1} parent=15 // pred_check_branch
          %255 = sbr.rel (%p253) target = $region28
        $region27: #{tpu_custom_call.1} parent=15 // pred_region
          %s256 = sand.u32 %s16, 1
          %s257 = scalar_lea.sflag [#allocation7], %s256
          %s258 = sand.u32 %s130, 1
          %s259 = smul.addr %s258, 16
          %s260 = scalar_lea.vmem [#allocation8], %s259
          %s261 = smul.u32 %s23, 3
          %s262 = sadd.s32 %s261, %s24
          %s263 = ssub.s32 %s262, 2
          %p264 = scmp.gt.s32.totalorder %s263, 0
          %s265 = scalar_select %p264, %s263, 0
          %p266 = scmp.lt.s32.totalorder %s265, 0
          %s267 = scalar_select %p266, %s265, 0
          %s268 = smul.u32 2, %s267
          %270 = vsyncadd %s257, 0
          %s271 = smul.addr %s268, 8
          %s272 = scalar_lea.hbm %s2, %s271
          %s273 = sshll.u32 %s272, 4
          %s274 = int_to_ptr.hbm [resolvable:$true] %s273
          %s275 = sshll.u32 %s260, 4
          %s276 = int_to_ptr.vmem [resolvable:$true] %s275
          %281 = dma.hbm_to_vmem [thread:$0]  %s274, 256, %s276, %s257, 128, 128, 8
        $region28: #{tpu_custom_call.1} parent=15 // pred_fallthru
          _
      $region16: #{tpu_custom_call.1} parent=5 // pred_fallthru
        _
      %p282 = scmp.le.s32.totalorder 1, %s16
      %p283 = scmp.lt.s32.totalorder %s16, 4
      %p284 = pnand %p282, %p283
      %p285 = pneg %p284
      // Predicated region
      $region29: #{tpu_custom_call.1} parent=5 // pred_check
        _
      $region30: #{tpu_custom_call.1} parent=5 // pred_check_branch
        %287 = sbr.rel (%p284) target = $region32
      $region31: #{tpu_custom_call.1} parent=5 // pred_region
        %s288 = ssub.s32 %s16, 1
        %s289 = sand.u32 %s53, 1
        %s290 = scalar_lea.sflag [#allocation4], %s289
        %s291 = sand.u32 %s53, 1
        %s292 = smul.addr %s291, 16
        %s293 = scalar_lea.vmem [#allocation3], %s292
        // Predicated region
        $region33: #{tpu_custom_call.1} parent=31 // pred_check
          %p294 = pneg %p66
        $region34: #{tpu_custom_call.1} parent=31 // pred_check_branch
          %296 = sbr.rel (%p294) target = $region36
        $region35: #{tpu_custom_call.1} parent=31 // pred_region
          %298 = dma.done %s290, 256
        $region36: #{tpu_custom_call.1} parent=31 // pred_fallthru
          _
        %s299 = sand.u32 %s21, 1
        %s300 = scalar_lea.sflag [#allocation7], %s299
        %s301 = sand.u32 %s93, 1
        %s302 = smul.addr %s301, 16
        %s303 = scalar_lea.vmem [#allocation6], %s302
        // Predicated region
        $region37: #{tpu_custom_call.1} parent=31 // pred_check
          %p304 = pneg %p106
        $region38: #{tpu_custom_call.1} parent=31 // pred_check_branch
          %306 = sbr.rel (%p304) target = $region40
        $region39: #{tpu_custom_call.1} parent=31 // pred_region
          %308 = dma.done %s300, 256
        $region40: #{tpu_custom_call.1} parent=31 // pred_fallthru
          _
        %s309 = sand.u32 %s21, 1
        %s310 = scalar_lea.sflag [#allocation7], %s309
        %s311 = sand.u32 %s133, 1
        %s312 = smul.addr %s311, 16
        %s313 = scalar_lea.vmem [#allocation8], %s312
        // Predicated region
        $region41: #{tpu_custom_call.1} parent=31 // pred_check
          %p314 = pneg %p146
        $region42: #{tpu_custom_call.1} parent=31 // pred_check_branch
          %316 = sbr.rel (%p314) target = $region44
        $region43: #{tpu_custom_call.1} parent=31 // pred_region
          %318 = dma.done %s310, 256
        $region44: #{tpu_custom_call.1} parent=31 // pred_fallthru
          _
        %s319 = sand.u32 %s53, 1
        %s320 = scalar_lea.sflag [#allocation4], %s319
        %s321 = sand.u32 %s53, 1
        %s322 = smul.addr %s321, 16
        %s323 = scalar_lea.vmem [#allocation3], %s322
        %p324 = pneg %p66
        %p325 = pneg %p63
        %s326 = sand.u32 %s21, 1
        %s327 = scalar_lea.sflag [#allocation7], %s326
        %s328 = sand.u32 %s93, 1
        %s329 = smul.addr %s328, 16
        %s330 = scalar_lea.vmem [#allocation6], %s329
        %p331 = pneg %p106
        %p332 = pneg %p103
        %s333 = sand.u32 %s21, 1
        %s334 = scalar_lea.sflag [#allocation7], %s333
        %s335 = sand.u32 %s133, 1
        %s336 = smul.addr %s335, 16
        %s337 = scalar_lea.vmem [#allocation8], %s336
        %p338 = pneg %p146
        %p339 = pneg %p143
        %p340 = pneg %p172
        %p341 = pneg %p169
        %s342 = smul.u32 %s25, 3
        %s343 = sadd.s32 %s342, %s26
        %p344 = scmp.gt.s32.totalorder %s343, 0
        %s345 = scalar_select %p344, %s343, 0
        %p346 = scmp.lt.s32.totalorder %s345, 0
        %s347 = scalar_select %p346, %s345, 0
        %s348 = smul.u32 2, %s347
        %s349 = smul.u32 %s25, 3
        %s350 = sadd.s32 %s349, %s26
        %s351 = ssub.s32 %s350, 1
        %p352 = scmp.gt.s32.totalorder %s351, 0
        %s353 = scalar_select %p352, %s351, 0
        %p354 = scmp.lt.s32.totalorder %s353, 0
        %s355 = scalar_select %p354, %s353, 0
        %s356 = smul.u32 4, %s355
        %s357 = ssub.s32 1, %s356
        %s358 = smul.u32 4, %s357
        %s359 = smul.u32 %s25, 3
        %s360 = sadd.s32 %s359, %s26
        %s361 = ssub.s32 %s360, 2
        %p362 = scmp.gt.s32.totalorder %s361, 0
        %s363 = scalar_select %p362, %s361, 0
        %p364 = scmp.lt.s32.totalorder %s363, 0
        %s365 = scalar_select %p364, %s363, 0
        %s366 = smul.u32 2, %s365
        %s367 = smul.u32 %s25, 3
        %s368 = sadd.s32 %s367, %s26
        %p369 = scmp.eq.s32.totalorder %s26, 0
        // Predicated region
        $region45: #{tpu_custom_call.1} parent=31 // pred_check
          %p370 = pneg %p369
        $region46: #{tpu_custom_call.1} parent=31 // pred_check_branch
          %372 = sbr.rel (%p370) target = $region48
        $region47: #{tpu_custom_call.1} parent=31 // pred_region
          %373 = vst [vmem:[#allocation2] sm:$0xff] 0.0
          %374 = vst [vmem:[#allocation2 + $0x8] sm:$0xff] 0.0
        $region48: #{tpu_custom_call.1} parent=31 // pred_fallthru
          _
        %p375 = scmp.ge.s32.totalorder %s368, 0
        %p376 = scmp.lt.s32.totalorder %s368, 1
        %p377 = pnand %p375, %p376
        %p378 = pneg %p377
        // Predicated region
        $region49: #{tpu_custom_call.1} parent=31 // pred_check
          _
        $region50: #{tpu_custom_call.1} parent=31 // pred_check_branch
          %380 = sbr.rel (%p377) target = $region52
        $region51: #{tpu_custom_call.1} parent=31 // pred_region
          %v381 = vld [vmem:[#allocation2] sm:$0xff]
          %v382 = vld [vmem:[#allocation2 + $0x8] sm:$0xff]
          %v383 = vld [vmem:[%s293] sm:$0xff]
          %v384 = vld [vmem:[%s293 + $0x8] sm:$0xff]
          %v385 = vsub.f32 %v383, 1.0
          %v386 = vsub.f32 %v384, 1.0
          %v387 = vmul.f32 %v385, %v385
          %v388 = vmul.f32 %v386, %v386
          %v389 = vadd.f32 %v387, 0.0
          %v390 = vadd.f32 %v388, 0.0
          %v391 = vmul.f32 %v389, 8.138021e-05
          %v392 = vmul.f32 %v390, 8.138021e-05
          %v393 = vadd.f32 %v381, %v391
          %v394 = vadd.f32 %v382, %v392
          %395 = vst [vmem:[#allocation2] sm:$0xff] %v393
          %396 = vst [vmem:[#allocation2 + $0x8] sm:$0xff] %v394
        $region52: #{tpu_custom_call.1} parent=31 // pred_fallthru
          _
        %p397 = scmp.eq.s32.totalorder %s368, 1
        // Predicated region
        $region53: #{tpu_custom_call.1} parent=31 // pred_check
          %p398 = pneg %p397
        $region54: #{tpu_custom_call.1} parent=31 // pred_check_branch
          %400 = sbr.rel (%p398) target = $region56
        $region55: #{tpu_custom_call.1} parent=31 // pred_region
          %v401 = vld [vmem:[#allocation2] sm:$0xff]
          %v402 = vld [vmem:[#allocation2 + $0x8] sm:$0xff]
          %v403 = vld [vmem:[%s303] sm:$0xff]
          %v404 = vld [vmem:[%s303 + $0x8] sm:$0xff]
          %v405 = vsub.f32 %v403, 1.0
          %v406 = vsub.f32 %v404, 1.0
          %v407 = vmul.f32 %v405, %v405
          %v408 = vmul.f32 %v406, %v406
          %v409 = vlaneseq
          %v410 = vshrl.u32 %v409, 7
          %v411 = vadd.s32 %v410, 8
          %v412 = vlaneseq
          %v413 = vand.u32 %v412, 127
          %v414 = vmul.u32 %v410, 128
          %v415 = vmul.u32 %v411, 128
          %v416 = vadd.s32 %v414, %v413
          %v417 = vadd.s32 %v415, %v413
          %vm418 = vcmp.lt.s32.totalorder %v416, 512
          %vm419 = vcmp.lt.s32.totalorder %v417, 512
          %v420 = vsel %vm418, %v407, 0.0
          %v421 = vsel %vm419, %v408, 0.0
          %v422 = vadd.f32 %v420, 0.0
          %v423 = vadd.f32 %v421, 0.0
          %v424 = vmul.f32 %v422, 0.00032552084
          %v425 = vmul.f32 %v423, 0.00032552084
          %v426 = vadd.f32 %v401, %v424
          %v427 = vadd.f32 %v402, %v425
          %428 = vst [vmem:[#allocation2] sm:$0xff] %v426
          %429 = vst [vmem:[#allocation2 + $0x8] sm:$0xff] %v427
        $region56: #{tpu_custom_call.1} parent=31 // pred_fallthru
          _
        %p430 = scmp.eq.s32.totalorder %s368, 2
        // Predicated region
        $region57: #{tpu_custom_call.1} parent=31 // pred_check
          %p431 = pneg %p430
        $region58: #{tpu_custom_call.1} parent=31 // pred_check_branch
          %433 = sbr.rel (%p431) target = $region60
        $region59: #{tpu_custom_call.1} parent=31 // pred_region
          %v434 = vld [vmem:[#allocation2] sm:$0xff]
          %v435 = vld [vmem:[#allocation2 + $0x8] sm:$0xff]
          %v436 = vld [vmem:[%s313] sm:$0xff]
          %v437 = vld [vmem:[%s313 + $0x8] sm:$0xff]
          %v438 = vsub.f32 %v436, 1.0
          %v439 = vsub.f32 %v437, 1.0
          %v440 = vmul.f32 %v438, %v438
          %v441 = vmul.f32 %v439, %v439
          %v442 = vlaneseq
          %v443 = vshrl.u32 %v442, 7
          %v444 = vadd.s32 %v443, 8
          %v445 = vlaneseq
          %v446 = vand.u32 %v445, 127
          %v447 = vmul.u32 %v443, 128
          %v448 = vmul.u32 %v444, 128
          %v449 = vadd.s32 %v447, %v446
          %v450 = vadd.s32 %v448, %v446
          %vm451 = vcmp.lt.s32.totalorder %v449, 1800
          %vm452 = vcmp.lt.s32.totalorder %v450, 1800
          %v453 = vsel %vm451, %v440, 0.0
          %v454 = vsel %vm452, %v441, 0.0
          %v455 = vadd.f32 %v453, 0.0
          %v456 = vadd.f32 %v454, 0.0
          %v457 = vmul.f32 %v455, 9.259259e-05
          %v458 = vmul.f32 %v456, 9.259259e-05
          %v459 = vadd.f32 %v434, %v457
          %v460 = vadd.f32 %v435, %v458
          %461 = vst [vmem:[#allocation2] sm:$0xff] %v459
          %462 = vst [vmem:[#allocation2 + $0x8] sm:$0xff] %v460
        $region60: #{tpu_custom_call.1} parent=31 // pred_fallthru
          _
        %p463 = scmp.eq.s32.totalorder %s26, 2
        // Predicated region
        $region61: #{tpu_custom_call.1} parent=31 // pred_check
          %p464 = pneg %p463
        $region62: #{tpu_custom_call.1} parent=31 // pred_check_branch
          %466 = sbr.rel (%p464) target = $region64
        $region63: #{tpu_custom_call.1} parent=31 // pred_region
          %v467 = vld [vmem:[#allocation2] sm:$0xff]
          %v468 = vld [vmem:[#allocation2 + $0x8] sm:$0xff]
          %v469 = vadd.f32 %v467, %v468
          %470 = vst [vmem:[#allocation9] sm:$0xff] %v469
        $region64: #{tpu_custom_call.1} parent=31 // pred_fallthru
          _
        // Predicated region
        $region65: #{tpu_custom_call.1} parent=31 // pred_check
          %p471 = pneg %p169
        $region66: #{tpu_custom_call.1} parent=31 // pred_check_branch
          %473 = sbr.rel (%p471) target = $region68
        $region67: #{tpu_custom_call.1} parent=31 // pred_region
          %475 = vsyncadd [#allocation5], 0
          %s476 = smul.addr %s25, 8
          %s477 = scalar_lea.hbm %s3, %s476
          %s479 = sshll.u32 [#allocation9], 4
          %s480 = int_to_ptr.vmem [resolvable:$true] %s479
          %s481 = sshll.u32 %s477, 4
          %s482 = int_to_ptr.hbm [resolvable:$true] %s481
          %484 = dma.vmem_to_hbm [thread:$0]  %s480, 128, %s482, [#allocation5]
        $region68: #{tpu_custom_call.1} parent=31 // pred_fallthru
          _
        // Predicated region
        $region69: #{tpu_custom_call.1} parent=31 // pred_check
          %p485 = pneg %p169
        $region70: #{tpu_custom_call.1} parent=31 // pred_check_branch
          %487 = sbr.rel (%p485) target = $region72
        $region71: #{tpu_custom_call.1} parent=31 // pred_region
          %489 = dma.done [#allocation5], 128
        $region72: #{tpu_custom_call.1} parent=31 // pred_fallthru
          _
      $region32: #{tpu_custom_call.1} parent=5 // pred_fallthru
        _
      %p490 = scmp.le.s32.totalorder 2, %s16
      // Predicated region
      $region73: #{tpu_custom_call.1} parent=5 // pred_check
        %p491 = pneg %p490
      $region74: #{tpu_custom_call.1} parent=5 // pred_check_branch
        %493 = sbr.rel (%p491) target = $region76
      $region75: #{tpu_custom_call.1} parent=5 // pred_region
        %s494 = ssub.s32 %s16, 2
      $region76: #{tpu_custom_call.1} parent=5 // pred_fallthru
        _
    $region6: #{tpu_custom_call.1} parent=1 // loop_footer
      %s20 = sadd.s32 1, %s16
    $region7: #{tpu_custom_call.1} parent=1 // loop_footer_branch
      %15 = sbr.rel target = $region3
    $region8: #{tpu_custom_call.1} parent=1 // loop_exit
      _
    %495 = vsyncpa [#allocation4], 1
    %s496 = scalar_lea.sflag [#allocation4], 1
    %497 = vsyncpa %s496, 1
    %498 = vsyncpa [#allocation7], 1
    %s499 = scalar_lea.sflag [#allocation7], 1
    %500 = vsyncpa %s499, 1
    %501 = vsyncpa [#allocation5], 1
    %s502 = scalar_lea.sflag [#allocation5], 1
    %503 = vsyncpa %s502, 1

</llo_original>
